<compile_context>
chip_gen: v5e
topology: v5e:2x2
jax: 0.10.0
libtpu: 0.0.40
codegen_flags: <defaults>
</compile_context>

<pallas_src>
import jax
import jax.numpy as jnp
from jax.experimental import pallas as pl
from jax.experimental.pallas import tpu as pltpu


# ---------------------------------------------------------------------------
# Kernel
# ---------------------------------------------------------------------------
def _mean_linear_kernel(x_ref, w_ref, b_ref, o_ref, acc_ref):
    """One (tile_b, tile_o) output tile of x @ W_mean + b_mean.

    x_ref  : (tile_b, tile_k)   bf16 activation tile
    w_ref  : (tile_k, tile_o)   bf16 pre-averaged ensemble weights
    b_ref  : (1, tile_o)        f32 pre-averaged ensemble bias
    o_ref  : (tile_b, tile_o)   output tile (caller dtype)
    acc_ref: (tile_b, tile_o)   f32 accumulator scratch (K reduction axis)
    """
    k = pl.program_id(2)

    @pl.when(k == 0)
    def _():
        acc_ref[...] = jnp.zeros_like(acc_ref)

    acc_ref[...] += jnp.dot(
        x_ref[...], w_ref[...], preferred_element_type=jnp.float32
    )

    @pl.when(k == pl.num_programs(2) - 1)
    def _():
        o_ref[...] = (acc_ref[...] + b_ref[...]).astype(o_ref.dtype)


# ---------------------------------------------------------------------------
# Tile selection helpers (divisor-aware, (8,128)-aligned, VMEM-budget aware)
# ---------------------------------------------------------------------------
def _tile(dim, target, align):
    """Largest divisor of `dim` that is <= target and a multiple of `align`.

    Falls back to the full dim (a full-extent block is always legal)."""
    if dim <= target:
        return dim
    cand = (min(target, dim) // align) * align
    while cand >= align:
        if dim % cand == 0:
            return cand
        cand -= align
    return dim


def _working_set_bytes(tb, to, tk, out_itemsize):
    # double-buffered bf16 x and w blocks, double-buffered output block,
    # f32 accumulator scratch, (1, to) f32 bias (negligible).
    return (
        2 * tb * tk * 2
        + 2 * tk * to * 2
        + 2 * tb * to * out_itemsize
        + tb * to * 4
        + 2 * to * 4
    )


def _select_tiles(batch, hidden, out_dim, out_itemsize, budget_bytes):
    tile_b = _tile(batch, 256, 8)
    tile_o = _tile(out_dim, 512, 128)
    tile_k = hidden  # refined below

    # Shrink the K tile first (only adds cheap sequential grid steps), then
    # the output tile, until the double-buffered working set fits the budget.
    for target_k in (2048, 1024, 512, 256, 128):
        tile_k = _tile(hidden, target_k, 128)
        if _working_set_bytes(tile_b, tile_o, tile_k, out_itemsize) <= budget_bytes:
            break
    for target_o in (512, 256, 128):
        if _working_set_bytes(tile_b, tile_o, tile_k, out_itemsize) <= budget_bytes:
            break
        tile_o = _tile(out_dim, target_o, 128)

    # v7x megacore: make sure there are >= 2 blocks along a parallel axis.
    if (out_dim // tile_o) * (batch // tile_b) == 1:
        if out_dim % 256 == 0:
            tile_o = out_dim // 2          # still a multiple of 128
        elif batch % 16 == 0:
            tile_b = batch // 2            # still a multiple of 8

    return tile_b, tile_o, tile_k


# ---------------------------------------------------------------------------
# Wrapper
# ---------------------------------------------------------------------------
def prepare_ensemble_params(weights, biases):
    """One-time fold of the ensemble (cache these across forward calls).

    weights: (M, H, O), biases: (M, O)
    returns: w_mean (H, O) bf16, b_mean (1, O) f32
    """
    w_mean = jnp.mean(weights.astype(jnp.float32), axis=0).astype(jnp.bfloat16)
    b_mean = jnp.mean(biases.astype(jnp.float32), axis=0, keepdims=True)
    return w_mean, b_mean


def ensemble_forward(
    x,
    w_mean,
    b_mean,
    *,
    tile_b=None,
    tile_o=None,
    tile_k=None,
    vmem_limit_bytes=64 << 20,
):
    """x: (B, H) -> (B, O) == mean over ensemble members of x @ W_m + b_m."""
    batch, hidden = x.shape
    hidden_w, out_dim = w_mean.shape
    assert hidden == hidden_w, "x / weight hidden-dim mismatch"
    assert b_mean.shape == (1, out_dim)
    out_dtype = x.dtype

    # bf16 activation operand (weights are already cached in bf16); f32 MXU acc.
    x_b = x.astype(jnp.bfloat16)
    b_f32 = b_mean.astype(jnp.float32)

    # Tile working-set budget kept well under the per-generation scoped VMEM
    # limit (raised explicitly below); conservative enough for v7x's 64 MiB.
    auto_b, auto_o, auto_k = _select_tiles(
        batch, hidden, out_dim, jnp.dtype(out_dtype).itemsize, budget_bytes=24 << 20
    )
    tile_b = auto_b if tile_b is None else tile_b
    tile_o = auto_o if tile_o is None else tile_o
    tile_k = auto_k if tile_k is None else tile_k
    assert batch % tile_b == 0 and out_dim % tile_o == 0 and hidden % tile_k == 0

    num_j = out_dim // tile_o   # out tiles   (outermost: weight slab reused)
    num_i = batch // tile_b     # batch tiles
    num_k = hidden // tile_k    # reduction steps (innermost, "arbitrary")

    return pl.pallas_call(
        _mean_linear_kernel,
        out_shape=jax.ShapeDtypeStruct((batch, out_dim), out_dtype),
        grid_spec=pltpu.PrefetchScalarGridSpec(
            num_scalar_prefetch=0,
            grid=(num_j, num_i, num_k),
            in_specs=[
                # x tile: varies with batch tile and K step.
                pl.BlockSpec((tile_b, tile_k), lambda j, i, k: (i, k)),
                # pre-averaged weight slab: varies with out tile and K step;
                # constant across the inner batch axis -> DMA'd once per j
                # when num_k == 1 (no re-streaming per batch tile).
                pl.BlockSpec((tile_k, tile_o), lambda j, i, k: (k, j)),
                # pre-averaged bias row for this out tile.
                pl.BlockSpec((1, tile_o), lambda j, i, k: (0, j)),
            ],
            out_specs=pl.BlockSpec((tile_b, tile_o), lambda j, i, k: (i, j)),
            scratch_shapes=[pltpu.VMEM((tile_b, tile_o), jnp.float32)],
        ),
        compiler_params=pltpu.CompilerParams(
            # (out tiles, batch tiles) are independent -> megacore-shardable;
            # the K axis carries the accumulator -> "arbitrary".
            dimension_semantics=("parallel", "parallel", "arbitrary"),
            vmem_limit_bytes=vmem_limit_bytes,
        ),
    )(x_b, w_mean, b_f32)


# ---------------------------------------------------------------------------
# Demo / self-test
# ---------------------------------------------------------------------------
if __name__ == "__main__":
    key = jax.random.PRNGKey(0)
    num_models, batch, hidden, out_dim = 4, 16, 32, 256

    kx, kw, kb = jax.random.split(key, 3)
    x = jax.random.normal(kx, (batch, hidden), dtype=jnp.float32)
    weights = (
        jax.random.normal(kw, (num_models, hidden, out_dim), dtype=jnp.float32) * 0.05
    )
    biases = jax.random.normal(kb, (num_models, out_dim), dtype=jnp.float32) * 0.01

    # One-time fold of the ensemble (would be cached across forward calls).
    w_mean, b_mean = prepare_ensemble_params(weights, biases)

    y = ensemble_forward(x, w_mean, b_mean)
    y = jax.block_until_ready(y)
    assert y.shape == (batch, out_dim)

    # Reference 1: identical bf16 operands, f32 accumulation (exact-ish match).
    y_ref = (
        jnp.dot(x.astype(jnp.bfloat16), w_mean, preferred_element_type=jnp.float32)
        + b_mean
    ).astype(x.dtype)
    assert jnp.allclose(y, y_ref, atol=1e-4, rtol=1e-4)

    # Reference 2: full-precision per-member ensemble mean (semantic check;
    # looser tolerance because operands are bf16 in the kernel).
    y_full = jnp.mean(
        jnp.einsum("bh,mho->mbo", x, weights) + biases[:, None, :], axis=0
    )
    assert jnp.allclose(y, y_full, atol=5e-2, rtol=5e-2)

    print("KERNEL_OK")
</pallas_src>

<mosaic_0001>
module attributes {stable_mosaic.version = 11 : i64} {
  func.func @_mean_linear_kernel(%arg0: i32, %arg1: i32, %arg2: i32, %arg3: memref<16x32xbf16, #tpu.memory_space<vmem>>, %arg4: memref<32x128xbf16, #tpu.memory_space<vmem>>, %arg5: memref<1x128xf32, #tpu.memory_space<vmem>>, %arg6: memref<16x128xf32, #tpu.memory_space<vmem>>, %arg7: memref<16x128xf32, #tpu.memory_space<vmem>>) attributes {dimension_semantics = [#tpu.dimension_semantics<parallel>, #tpu.dimension_semantics<parallel>, #tpu.dimension_semantics<arbitrary>], iteration_bounds = array<i64: 2, 1, 1>, scalar_prefetch = 0 : i64, scratch_operands = 1 : i64, tpu.core_type = #tpu.core_type<tc>, window_params = [{transform_indices = @transform_0, window_bounds = array<i64: 16, 32>}, {transform_indices = @transform_1, window_bounds = array<i64: 32, 128>}, {transform_indices = @transform_2, window_bounds = array<i64: 1, 128>}, {transform_indices = @transform_3, window_bounds = array<i64: 16, 128>}]} {
    %c0_i32 = arith.constant 0 : i32
    %0 = arith.cmpi eq, %arg2, %c0_i32 : i32
    %1 = arith.extui %0 : i1 to i32
    %c0_i32_0 = arith.constant 0 : i32
    %2 = arith.cmpi ne, %1, %c0_i32_0 : i32
    scf.if %2 {
      %cst_10 = arith.constant 0.000000e+00 : f32
      %12 = vector.broadcast %cst_10 : f32 to vector<16x128xf32>
      %c0_11 = arith.constant 0 : index
      %c0_12 = arith.constant 0 : index
      %13 = vector.load %arg7[%c0_11, %c0_12] : memref<16x128xf32, #tpu.memory_space<vmem>>, vector<16x128xf32>
      tpu.vector_store %arg7[%c0_11, %c0_12], %12 {strides = array<i32>} : memref<16x128xf32, #tpu.memory_space<vmem>>, vector<16x128xf32>,
    } else {
    }
    %c0 = arith.constant 0 : index
    %c0_1 = arith.constant 0 : index
    %3 = vector.load %arg7[%c0, %c0_1] : memref<16x128xf32, #tpu.memory_space<vmem>>, vector<16x128xf32>
    %c0_2 = arith.constant 0 : index
    %c0_3 = arith.constant 0 : index
    %4 = vector.load %arg3[%c0_2, %c0_3] : memref<16x32xbf16, #tpu.memory_space<vmem>>, vector<16x32xbf16>
    %c0_4 = arith.constant 0 : index
    %c0_5 = arith.constant 0 : index
    %5 = vector.load %arg4[%c0_4, %c0_5] : memref<32x128xbf16, #tpu.memory_space<vmem>>, vector<32x128xbf16>
    %cst = arith.constant dense<0.000000e+00> : vector<16x128xf32>
    %6 = tpu.matmul %4, %5, %cst {dimension_numbers = #tpu.dot_dimension_numbers<[1], [0], [0], [1], [0, 0, 1, 1], [], []>} : vector<16x32xbf16>, vector<32x128xbf16>, vector<16x128xf32> -> vector<16x128xf32>
    %7 = arith.addf %3, %6 : vector<16x128xf32>
    %c0_6 = arith.constant 0 : index
    %c0_7 = arith.constant 0 : index
    %8 = vector.load %arg7[%c0_6, %c0_7] : memref<16x128xf32, #tpu.memory_space<vmem>>, vector<16x128xf32>
    tpu.vector_store %arg7[%c0_6, %c0_7], %7 {strides = array<i32>} : memref<16x128xf32, #tpu.memory_space<vmem>>, vector<16x128xf32>,
    %c0_i32_8 = arith.constant 0 : i32
    %9 = arith.cmpi eq, %arg2, %c0_i32_8 : i32
    %10 = arith.extui %9 : i1 to i32
    %c0_i32_9 = arith.constant 0 : i32
    %11 = arith.cmpi ne, %10, %c0_i32_9 : i32
    scf.if %11 {
      %c0_10 = arith.constant 0 : index
      %c0_11 = arith.constant 0 : index
      %12 = vector.load %arg7[%c0_10, %c0_11] : memref<16x128xf32, #tpu.memory_space<vmem>>, vector<16x128xf32>
      %c0_12 = arith.constant 0 : index
      %c0_13 = arith.constant 0 : index
      %13 = vector.load %arg5[%c0_12, %c0_13] : memref<1x128xf32, #tpu.memory_space<vmem>>, vector<1x128xf32>
      %14 = vector.broadcast %13 : vector<1x128xf32> to vector<16x128xf32>
      %15 = arith.addf %12, %14 : vector<16x128xf32>
      %c0_14 = arith.constant 0 : index
      %c0_15 = arith.constant 0 : index
      %16 = vector.load %arg6[%c0_14, %c0_15] : memref<16x128xf32, #tpu.memory_space<vmem>>, vector<16x128xf32>
      tpu.vector_store %arg6[%c0_14, %c0_15], %15 {strides = array<i32>} : memref<16x128xf32, #tpu.memory_space<vmem>>, vector<16x128xf32>,
    } else {
    }
    return
  }
  func.func @transform_0(%arg0: i32, %arg1: i32, %arg2: i32) -> (i32, i32) {
    %c0_i32 = arith.constant 0 : i32
    return %arg1, %arg2 : i32, i32
  }
  func.func @transform_1(%arg0: i32, %arg1: i32, %arg2: i32) -> (i32, i32) {
    %c0_i32 = arith.constant 0 : i32
    return %arg2, %arg0 : i32, i32
  }
  func.func @transform_2(%arg0: i32, %arg1: i32, %arg2: i32) -> (i32, i32) {
    %c0_i32 = arith.constant 0 : i32
    %c0_i32_0 = arith.constant 0 : i32
    return %c0_i32, %arg0 : i32, i32
  }
  func.func @transform_3(%arg0: i32, %arg1: i32, %arg2: i32) -> (i32, i32) {
    %c0_i32 = arith.constant 0 : i32
    return %arg1, %arg0 : i32, i32
  }
}

</mosaic_0001>

<llo_original>
// kernel: tpu_custom_call.1
$region0: #{tpu_custom_call.1}
  #allocation0 [shape = 'u32[]', space=smem, size = 0x4, offset = 0x4, fixed_abs, tag = 'smem constant byte address 0x4 - core index']
  #allocation1 [shape = 'u32[72,128]{1,0:T(1,128)}', space=vmem, size = 0x9000, scoped, tag = 'internal scratch']
  #allocation2 [shape = 'f32[16,128]{1,0:T(8,128)}', space=vmem, size = 0x2000, scoped, tag = 'scratch operand']
  %s0 = inlined_call_operand.hbm [shape: bf16[16,32], index: 0, kind: input, shape index: {}]
  %s1 = inlined_call_operand.hbm [shape: bf16[32,256], index: 1, kind: input, shape index: {}]
  %s2 = inlined_call_operand.hbm [shape: f32[1,256], index: 2, kind: input, shape index: {}]
  %s3 = inlined_call_operand.hbm [shape: f32[16,256], index: 3, kind: output, shape index: {}]
  %s4 = sld [smem:[#allocation0]]
  $region65: #{tpu_custom_call.1} parent=0
    _
  %s6 = ssub.s32 1, %s4
  %s7 = scalar_select 0, %s6, %s4
  $region1: #{tpu_custom_call.1} parent=0
    #allocation3 [shape = 'u8[4096]{0}', space=vmem, size = 0x1000, scoped, tag = 'input window, operand 0, single buffered']
    #allocation4 [shape = 's32[2]{0}', space=sflag, size = 0x8, scoped, tag = 'scoped memory for tpu_custom_call.1']
    #allocation5 [shape = 's32[2]{0}', space=sflag, size = 0x8, scoped, tag = 'scoped memory for tpu_custom_call.1']
    #allocation6 [shape = 'u8[16384]{0}', space=vmem, size = 0x4000, scoped, tag = 'input window, operand 1']
    #allocation7 [shape = 's32[2]{0}', space=sflag, size = 0x8, scoped, tag = 'scoped memory for tpu_custom_call.1']
    #allocation8 [shape = 'u8[1024]{0}', space=vmem, size = 0x400, scoped, tag = 'input window, operand 2']
    #allocation9 [shape = 'u8[16384]{0}', space=vmem, size = 0x4000, scoped, tag = 'output window, operand 0']
    %8 = vsyncpa [#allocation4], 0
    %9 = vsyncpa [#allocation7], 0
    %s10 = scalar_lea.sflag [#allocation7], 1
    %11 = vsyncpa %s10, 0
    %12 = vsyncpa [#allocation5], 0
    %s13 = scalar_lea.sflag [#allocation5], 1
    %14 = vsyncpa %s13, 0
    loop: start=0, step=1, limit=4
    $region2: #{tpu_custom_call.1} parent=1 // loop_pre_header
      _
    $region3: #{tpu_custom_call.1} parent=1 // loop_header
      %s16 = sphi 0, %s20
      %p17 = scmp.ge.s32.totalorder %s16, 4
      %s23 = sphi 0, %s42
      %s24 = sphi 0, %s38
      %s25 = sphi 0, %s34
      %s26 = sphi 0, %s23
      %s27 = sphi 0, %s24
      %s28 = sphi 0, %s25
      %s29 = sphi 0, %s26
      %s30 = sphi 0, %s27
      %s31 = sphi 0, %s28
      %s47 = sphi 0, %s49
      %s50 = sphi 0, %s47
      %s51 = sphi 0, %s50
      %s67 = sphi 0, %s51
      %s75 = sphi 0, %s77
      %s78 = sphi 0, %s75
      %s79 = sphi 0, %s78
      %s95 = sphi 0, %s79
      %s101 = sphi 0, %s103
      %s104 = sphi 0, %s101
      %s105 = sphi 0, %s104
      %s121 = sphi 0, %s105
      %s129 = sphi 0, %s131
      %s132 = sphi 0, %s129
      %s133 = sphi 0, %s132
      %s149 = sphi 0, %s133
    $region4: #{tpu_custom_call.1} parent=1 // loop_header_branch
      %19 = sbr.rel (%p17) target = $region8
    $region5: #{tpu_custom_call.1} parent=1 // loop_body
      %s21 = ssub.s32 %s16, 1
      %s22 = ssub.s32 %s16, 2
      %s32 = sadd.s32 1, %s25
      %p33 = scmp.ge.s32.totalorder %s32, 1
      %s34 = scalar_select %p33, 0, %s32
      %s35 = sadd.s32 1, %s24
      %s36 = scalar_select %p33, %s35, %s24
      %p37 = scmp.ge.s32.totalorder %s36, 1
      %s38 = scalar_select %p37, 0, %s36
      %s39 = sadd.s32 1, %s23
      %s40 = scalar_select %p37, %s39, %s23
      %p41 = scmp.ge.s32.totalorder %s40, 2
      %s42 = scalar_select %p41, 0, %s40
      %s43 = ssub.s32 %s24, %s38
      %s44 = ssub.s32 %s25, %s34
      %s45 = sor.u32 %s43, %s44
      %p46 = scmp.eq.s32.totalorder %s45, 0
      %s48 = sadd.s32 %s47, 1
      %s49 = scalar_select %p46, %s47, %s48
      %p52 = pneg %p46
      %p53 = scmp.eq.s32.totalorder %s16, 1
      %p54 = por %p52, %p53
      %p55 = scmp.ne.s32.totalorder %s47, %s50
      %p56 = scmp.eq.s32.totalorder %s16, 0
      %p57 = por %p55, %p56
      %p58 = scmp.ne.s32.totalorder %s47, %s50
      %p59 = scmp.eq.s32.totalorder %s21, 1
      %p60 = por %p58, %p59
      %p61 = scmp.ne.s32.totalorder %s50, %s51
      %p62 = scmp.eq.s32.totalorder %s21, 0
      %p63 = por %p61, %p62
      %p64 = scmp.ne.s32.totalorder %s50, %s51
      %p65 = scmp.eq.s32.totalorder %s22, 1
      %p66 = por %p64, %p65
      %p68 = scmp.ne.s32.totalorder %s51, %s67
      %p69 = scmp.eq.s32.totalorder %s22, 0
      %p70 = por %p68, %p69
      %s71 = ssub.s32 %s25, %s34
      %s72 = ssub.s32 %s23, %s42
      %s73 = sor.u32 %s71, %s72
      %p74 = scmp.eq.s32.totalorder %s73, 0
      %s76 = sadd.s32 %s75, 1
      %s77 = scalar_select %p74, %s75, %s76
      %p80 = pneg %p74
      %p81 = scmp.eq.s32.totalorder %s16, 1
      %p82 = por %p80, %p81
      %p83 = scmp.ne.s32.totalorder %s75, %s78
      %p84 = scmp.eq.s32.totalorder %s16, 0
      %p85 = por %p83, %p84
      %p86 = scmp.ne.s32.totalorder %s75, %s78
      %p87 = scmp.eq.s32.totalorder %s21, 1
      %p88 = por %p86, %p87
      %p89 = scmp.ne.s32.totalorder %s78, %s79
      %p90 = scmp.eq.s32.totalorder %s21, 0
      %p91 = por %p89, %p90
      %p92 = scmp.ne.s32.totalorder %s78, %s79
      %p93 = scmp.eq.s32.totalorder %s22, 1
      %p94 = por %p92, %p93
      %p96 = scmp.ne.s32.totalorder %s79, %s95
      %p97 = scmp.eq.s32.totalorder %s22, 0
      %p98 = por %p96, %p97
      %s99 = ssub.s32 %s23, %s42
      %p100 = scmp.eq.s32.totalorder %s99, 0
      %s102 = sadd.s32 %s101, 1
      %s103 = scalar_select %p100, %s101, %s102
      %p106 = pneg %p100
      %p107 = scmp.eq.s32.totalorder %s16, 1
      %p108 = por %p106, %p107
      %p109 = scmp.ne.s32.totalorder %s101, %s104
      %p110 = scmp.eq.s32.totalorder %s16, 0
      %p111 = por %p109, %p110
      %p112 = scmp.ne.s32.totalorder %s101, %s104
      %p113 = scmp.eq.s32.totalorder %s21, 1
      %p114 = por %p112, %p113
      %p115 = scmp.ne.s32.totalorder %s104, %s105
      %p116 = scmp.eq.s32.totalorder %s21, 0
      %p117 = por %p115, %p116
      %p118 = scmp.ne.s32.totalorder %s104, %s105
      %p119 = scmp.eq.s32.totalorder %s22, 1
      %p120 = por %p118, %p119
      %p122 = scmp.ne.s32.totalorder %s105, %s121
      %p123 = scmp.eq.s32.totalorder %s22, 0
      %p124 = por %p122, %p123
      %s125 = ssub.s32 %s24, %s38
      %s126 = ssub.s32 %s23, %s42
      %s127 = sor.u32 %s125, %s126
      %p128 = scmp.eq.s32.totalorder %s127, 0
      %s130 = sadd.s32 %s129, 1
      %s131 = scalar_select %p128, %s129, %s130
      %p134 = pneg %p128
      %p135 = scmp.eq.s32.totalorder %s16, 1
      %p136 = por %p134, %p135
      %p137 = scmp.ne.s32.totalorder %s129, %s132
      %p138 = scmp.eq.s32.totalorder %s16, 0
      %p139 = por %p137, %p138
      %p140 = scmp.ne.s32.totalorder %s129, %s132
      %p141 = scmp.eq.s32.totalorder %s21, 1
      %p142 = por %p140, %p141
      %p143 = scmp.ne.s32.totalorder %s132, %s133
      %p144 = scmp.eq.s32.totalorder %s21, 0
      %p145 = por %p143, %p144
      %p146 = scmp.ne.s32.totalorder %s132, %s133
      %p147 = scmp.eq.s32.totalorder %s22, 1
      %p148 = por %p146, %p147
      %p150 = scmp.ne.s32.totalorder %s133, %s149
      %p151 = scmp.eq.s32.totalorder %s22, 0
      %p152 = por %p150, %p151
      %p153 = scmp.le.s32.totalorder 1, %s16
      %p154 = scmp.lt.s32.totalorder %s16, 3
      %p155 = pnand %p153, %p154
      %p156 = pneg %p155
      // Predicated region
      $region9: #{tpu_custom_call.1} parent=5 // pred_check
        _
      $region10: #{tpu_custom_call.1} parent=5 // pred_check_branch
        %158 = sbr.rel (%p155) target = $region12
      $region11: #{tpu_custom_call.1} parent=5 // pred_region
        %s159 = ssub.s32 %s16, 1
        // Predicated region
        $region13: #{tpu_custom_call.1} parent=11 // pred_check
          %p160 = pneg %p63
        $region14: #{tpu_custom_call.1} parent=11 // pred_check_branch
          %162 = sbr.rel (%p160) target = $region16
        $region15: #{tpu_custom_call.1} parent=11 // pred_region
          %s163 = smul.u32 2, %s27
          %165 = vsyncadd [#allocation4], 0
          %s166 = sadd.s32 %s28, %s163
          %s167 = smul.addr %s166, 4
          %s168 = scalar_lea.hbm %s0, %s167
          %s169 = sshll.u32 %s168, 4
          %s170 = int_to_ptr.hbm [resolvable:$true] %s169
          %s171 = sshll.u32 [#allocation3], 4
          %s172 = int_to_ptr.vmem [resolvable:$true] %s171
          %177 = dma.hbm_to_vmem [thread:$0]  %s170, 128, %s172, [#allocation4], 64, 64, 4
        $region16: #{tpu_custom_call.1} parent=11 // pred_fallthru
          _
      $region12: #{tpu_custom_call.1} parent=5 // pred_fallthru
        _
      %p178 = scmp.lt.s32.totalorder %s16, 2
      // Predicated region
      $region17: #{tpu_custom_call.1} parent=5 // pred_check
        %p179 = pneg %p178
      $region18: #{tpu_custom_call.1} parent=5 // pred_check_branch
        %181 = sbr.rel (%p179) target = $region20
      $region19: #{tpu_custom_call.1} parent=5 // pred_region
        // Predicated region
        $region21: #{tpu_custom_call.1} parent=19 // pred_check
          %p182 = pneg %p85
        $region22: #{tpu_custom_call.1} parent=19 // pred_check_branch
          %184 = sbr.rel (%p182) target = $region24
        $region23: #{tpu_custom_call.1} parent=19 // pred_region
          %s185 = sand.u32 %s16, 1
          %s186 = scalar_lea.sflag [#allocation7], %s185
          %s187 = sand.u32 %s75, 1
          %s188 = smul.addr %s187, 16
          %s189 = scalar_lea.vmem [#allocation6], %s188
          %s190 = smul.u32 4, %s25
          %192 = vsyncadd %s186, 0
          %s193 = smul.addr %s190, 2
          %s194 = sadd.s32 %s23, %s193
          %s195 = smul.addr %s194, 4
          %s196 = scalar_lea.hbm %s1, %s195
          %s197 = sshll.u32 %s196, 4
          %s198 = int_to_ptr.hbm [resolvable:$true] %s197
          %s199 = sshll.u32 %s189, 4
          %s200 = int_to_ptr.vmem [resolvable:$true] %s199
          %205 = dma.hbm_to_vmem [thread:$0]  %s198, 256, %s200, %s186, 128, 64, 4
        $region24: #{tpu_custom_call.1} parent=19 // pred_fallthru
          _
        // Predicated region
        $region25: #{tpu_custom_call.1} parent=19 // pred_check
          %p206 = pneg %p111
        $region26: #{tpu_custom_call.1} parent=19 // pred_check_branch
          %208 = sbr.rel (%p206) target = $region28
        $region27: #{tpu_custom_call.1} parent=19 // pred_region
          %s209 = sand.u32 %s16, 1
          %s210 = scalar_lea.sflag [#allocation7], %s209
          %s211 = sand.u32 %s101, 1
          %s212 = scalar_lea.vmem [#allocation8], %s211
          %214 = vsyncadd %s210, 0
          %s215 = scalar_lea.hbm %s2, %s23
          %s217 = sshll.u32 %s215, 4
          %s218 = int_to_ptr.hbm [resolvable:$true] %s217
          %s219 = sshll.u32 %s212, 4
          %s220 = int_to_ptr.vmem [resolvable:$true] %s219
          %222 = dma.hbm_to_vmem [thread:$0]  %s218, 16, %s220, %s210
        $region28: #{tpu_custom_call.1} parent=19 // pred_fallthru
          _
      $region20: #{tpu_custom_call.1} parent=5 // pred_fallthru
        _
      %p223 = scmp.le.s32.totalorder 1, %s16
      %p224 = scmp.lt.s32.totalorder %s16, 3
      %p225 = pnand %p223, %p224
      %p226 = pneg %p225
      // Predicated region
      $region29: #{tpu_custom_call.1} parent=5 // pred_check
        _
      $region30: #{tpu_custom_call.1} parent=5 // pred_check_branch
        %228 = sbr.rel (%p225) target = $region32
      $region31: #{tpu_custom_call.1} parent=5 // pred_region
        %s229 = ssub.s32 %s16, 1
        // Predicated region
        $region33: #{tpu_custom_call.1} parent=31 // pred_check
          %p230 = pneg %p63
        $region34: #{tpu_custom_call.1} parent=31 // pred_check_branch
          %232 = sbr.rel (%p230) target = $region36
        $region35: #{tpu_custom_call.1} parent=31 // pred_region
          %234 = dma.done [#allocation4], 128
        $region36: #{tpu_custom_call.1} parent=31 // pred_fallthru
          _
        %s235 = sand.u32 %s21, 1
        %s236 = scalar_lea.sflag [#allocation7], %s235
        %s237 = sand.u32 %s78, 1
        %s238 = smul.addr %s237, 16
        %s239 = scalar_lea.vmem [#allocation6], %s238
        // Predicated region
        $region37: #{tpu_custom_call.1} parent=31 // pred_check
          %p240 = pneg %p91
        $region38: #{tpu_custom_call.1} parent=31 // pred_check_branch
          %242 = sbr.rel (%p240) target = $region40
        $region39: #{tpu_custom_call.1} parent=31 // pred_region
          %244 = dma.done %s236, 256
        $region40: #{tpu_custom_call.1} parent=31 // pred_fallthru
          _
        %s245 = sand.u32 %s21, 1
        %s246 = scalar_lea.sflag [#allocation7], %s245
        %s247 = sand.u32 %s104, 1
        %s248 = scalar_lea.vmem [#allocation8], %s247
        // Predicated region
        $region41: #{tpu_custom_call.1} parent=31 // pred_check
          %p249 = pneg %p117
        $region42: #{tpu_custom_call.1} parent=31 // pred_check_branch
          %251 = sbr.rel (%p249) target = $region44
        $region43: #{tpu_custom_call.1} parent=31 // pred_region
          %253 = dma.done %s246, 16
        $region44: #{tpu_custom_call.1} parent=31 // pred_fallthru
          _
        %p254 = pneg %p63
        %p255 = pneg %p60
        %s256 = sand.u32 %s21, 1
        %s257 = scalar_lea.sflag [#allocation7], %s256
        %s258 = sand.u32 %s78, 1
        %s259 = smul.addr %s258, 16
        %s260 = scalar_lea.vmem [#allocation6], %s259
        %p261 = pneg %p91
        %p262 = pneg %p88
        %s263 = sand.u32 %s21, 1
        %s264 = scalar_lea.sflag [#allocation7], %s263
        %s265 = sand.u32 %s104, 1
        %s266 = scalar_lea.vmem [#allocation8], %s265
        %p267 = pneg %p117
        %p268 = pneg %p114
        %p269 = pneg %p145
        %p270 = pneg %p142
        %s271 = sand.u32 %s132, 1
        %s272 = scalar_lea.sflag [#allocation5], %s271
        %s273 = sand.u32 %s132, 1
        %s274 = smul.addr %s273, 16
        %s275 = scalar_lea.vmem [#allocation9], %s274
        %s276 = smul.u32 2, %s27
        %s277 = smul.u32 4, %s28
        %s278 = smul.u32 2, %s27
        %p280 = scmp.eq.s32.totalorder %s28, 0
        // Predicated region
        $region45: #{tpu_custom_call.1} parent=31 // pred_check
          %p281 = pneg %p280
        $region46: #{tpu_custom_call.1} parent=31 // pred_check_branch
          %283 = sbr.rel (%p281) target = $region48
        $region47: #{tpu_custom_call.1} parent=31 // pred_region
          %284 = vst [vmem:[#allocation2] sm:$0xff] 0.0
          %285 = vst [vmem:[#allocation2 + $0x8] sm:$0xff] 0.0
        $region48: #{tpu_custom_call.1} parent=31 // pred_fallthru
          _
        %v286 = vld [vmem:[#allocation2] sm:$0xff]
        %v287 = vld [vmem:[#allocation2 + $0x8] sm:$0xff]
        %v288 = vld [vmem:[#allocation3] sm:$0xf]
        %v289 = vld [vmem:[#allocation3 + $0x4] sm:$0xf]
        %v290 = vld [vmem:[%s239] sm:$0xf]
        %v291 = vld [vmem:[%s239 + $0x4] sm:$0xf]
        %v292 = vld [vmem:[%s239 + $0x8] sm:$0xf]
        %v293 = vld [vmem:[%s239 + $0xc] sm:$0xf]
        %v296 = vunpack.c.l.b16 %v288
        %v297 = vunpack.c.l.b16 %v289
        %v298 = vpack.c.b16 %v297, %v296
        %v303 = vunpack.c.l.b16 %v290
        %v304 = vunpack.c.l.b16 %v291
        %v305 = vunpack.c.l.b16 %v292
        %v306 = vunpack.c.l.b16 %v293
        %v307 = vpack.c.b16 %v304, %v303
        %v308 = vpack.c.b16 %v306, %v305
        %vm311 = vcmask 261120
        %v313 = vsel %vm311, %v298, 0
        %315 = vmatpush.bf16.msra.mxu0 0
        %316 = vmatpush.bf16.msra.mxu0 0
        %317 = vmatpush.bf16.msra.mxu0 0
        %318 = vmatpush.bf16.msra.mxu0 0
        %319 = vmatpush.bf16.msra.mxu0 0
        %320 = vmatpush.bf16.msra.mxu0 0
        %321 = vmatpush.bf16.msra.mxu0 %v308
        %322 = vmatpush.bf16.msra.mxu0 %v307
        %323 = vmatmul.bf16.gmra.mxu0 %v313
        %v324 = vpop.f32.mrf.mxu0
        %v325 = vadd.f32 0.0, %v324
        %v326 = vpop.f32.mrf.mxu0
        %v327 = vadd.f32 0.0, %v326
        %328 = vdwg.mxu0
        %v329 = vadd.f32 %v286, %v325
        %v330 = vadd.f32 %v287, %v327
        %331 = vst [vmem:[#allocation2] sm:$0xff] %v329
        %332 = vst [vmem:[#allocation2 + $0x8] sm:$0xff] %v330
        // Predicated region
        $region49: #{tpu_custom_call.1} parent=31 // pred_check
          %p333 = pneg %p280
        $region50: #{tpu_custom_call.1} parent=31 // pred_check_branch
          %335 = sbr.rel (%p333) target = $region52
        $region51: #{tpu_custom_call.1} parent=31 // pred_region
          %v336 = vld [vmem:[#allocation2] sm:$0xff]
          %v337 = vld [vmem:[#allocation2 + $0x8] sm:$0xff]
          %v338 = vld [vmem:[%s248] sm:$0x1]
          %v340 = vperm.slane %v338, 0
          %v342 = vadd.f32 %v336, %v340
          %v343 = vadd.f32 %v337, %v340
          %344 = vst [vmem:[%s275] sm:$0xff] %v342
          %345 = vst [vmem:[%s275 + $0x8] sm:$0xff] %v343
        $region52: #{tpu_custom_call.1} parent=31 // pred_fallthru
          _
        %s346 = sand.u32 %s132, 1
        %s347 = scalar_lea.sflag [#allocation5], %s346
        %s348 = sand.u32 %s132, 1
        %s349 = smul.addr %s348, 16
        %s350 = scalar_lea.vmem [#allocation9], %s349
        // Predicated region
        $region53: #{tpu_custom_call.1} parent=31 // pred_check
          %p351 = pneg %p142
        $region54: #{tpu_custom_call.1} parent=31 // pred_check_branch
          %353 = sbr.rel (%p351) target = $region56
        $region55: #{tpu_custom_call.1} parent=31 // pred_region
          %s354 = smul.u32 2, %s27
          %356 = vsyncadd %s347, 0
          %s357 = smul.addr %s354, 2
          %s358 = sadd.s32 %s26, %s357
          %s359 = smul.addr %s358, 8
          %s360 = scalar_lea.hbm %s3, %s359
          %s361 = sshll.u32 %s350, 4
          %s362 = int_to_ptr.vmem [resolvable:$true] %s361
          %s363 = sshll.u32 %s360, 4
          %s364 = int_to_ptr.hbm [resolvable:$true] %s363
          %369 = dma.vmem_to_hbm [thread:$0]  %s362, 256, %s364, %s347, 128, 256, 8
        $region56: #{tpu_custom_call.1} parent=31 // pred_fallthru
          _
      $region32: #{tpu_custom_call.1} parent=5 // pred_fallthru
        _
      %p370 = scmp.le.s32.totalorder 2, %s16
      // Predicated region
      $region57: #{tpu_custom_call.1} parent=5 // pred_check
        %p371 = pneg %p370
      $region58: #{tpu_custom_call.1} parent=5 // pred_check_branch
        %373 = sbr.rel (%p371) target = $region60
      $region59: #{tpu_custom_call.1} parent=5 // pred_region
        %s374 = ssub.s32 %s16, 2
        // Predicated region
        $region61: #{tpu_custom_call.1} parent=59 // pred_check
          %p375 = pneg %p148
        $region62: #{tpu_custom_call.1} parent=59 // pred_check_branch
          %377 = sbr.rel (%p375) target = $region64
        $region63: #{tpu_custom_call.1} parent=59 // pred_region
          %s378 = sand.u32 %s133, 1
          %s379 = scalar_lea.sflag [#allocation5], %s378
          %s380 = sand.u32 %s133, 1
          %s381 = smul.addr %s380, 16
          %s382 = scalar_lea.vmem [#allocation9], %s381
          %384 = dma.done %s379, 256
        $region64: #{tpu_custom_call.1} parent=59 // pred_fallthru
          _
      $region60: #{tpu_custom_call.1} parent=5 // pred_fallthru
        _
    $region6: #{tpu_custom_call.1} parent=1 // loop_footer
      %s20 = sadd.s32 1, %s16
    $region7: #{tpu_custom_call.1} parent=1 // loop_footer_branch
      %15 = sbr.rel target = $region3
    $region8: #{tpu_custom_call.1} parent=1 // loop_exit
      _
    %385 = vsyncpa [#allocation4], 1
    %s386 = scalar_lea.sflag [#allocation4], 1
    %387 = vsyncpa %s386, 1
    %388 = vsyncpa [#allocation7], 1
    %s389 = scalar_lea.sflag [#allocation7], 1
    %390 = vsyncpa %s389, 1
    %391 = vsyncpa [#allocation5], 1
    %s392 = scalar_lea.sflag [#allocation5], 1
    %393 = vsyncpa %s392, 1

</llo_original>
